<compile_context>
chip_gen: v7x
topology: tpu7x:2x2x1
jax: 0.10.0
libtpu: 0.0.40
codegen_flags: <defaults>
</compile_context>

<pallas_src>
import jax
import jax.numpy as jnp
from jax.experimental import pallas as pl
from jax.experimental.pallas import tpu as pltpu


# ---------------------------------------------------------------------------
# pltpu.roll capability / direction probe (resolved once, lazily).
#   "jnp"     : roll(x, s)[i] == x[(i - s) % n]   (same as jnp.roll)
#   "reverse" : roll(x, s)[i] == x[(i + s) % n]
#   "off"     : roll unavailable -> use the scratch-pad fallback path.
# ---------------------------------------------------------------------------
_ROLL_MODE = None


def _roll_direction():
    global _ROLL_MODE
    if _ROLL_MODE is not None:
        return _ROLL_MODE
    try:
        def probe(x_ref, o_ref):
            a = pltpu.roll(x_ref[...], shift=1, axis=1)
            b = pltpu.roll(x_ref[...], shift=255, axis=1)
            o_ref[...] = a + 1000.0 * b

        x = jax.lax.broadcasted_iota(jnp.float32, (8, 256), 1)
        got = jax.block_until_ready(
            pl.pallas_call(
                probe,
                out_shape=jax.ShapeDtypeStruct((8, 256), jnp.float32))(x))
        want_jnp = jnp.roll(x, 1, axis=1) + 1000.0 * jnp.roll(x, 255, axis=1)
        want_rev = jnp.roll(x, -1, axis=1) + 1000.0 * jnp.roll(x, -255, axis=1)
        if bool(jnp.array_equal(got, want_jnp)):
            _ROLL_MODE = "jnp"
        elif bool(jnp.array_equal(got, want_rev)):
            _ROLL_MODE = "reverse"
        else:
            _ROLL_MODE = "off"
    except Exception:  # lowering unsupported -> safe (correct) fallback path
        _ROLL_MODE = "off"
    return _ROLL_MODE


# ---------------------------------------------------------------------------
# Kernels
# ---------------------------------------------------------------------------
def _make_roll_kernel(K, pad, roll_dir):
    """Shifted multiply-accumulate via XLU lane rotations (lane-aligned L)."""

    def kernel(x_ref, w_ref, o_ref):
        R, L = x_ref.shape
        L_out = o_ref.shape[1]
        x = x_ref[...].astype(jnp.float32)          # cast hoisted out of tap loop
        w = w_ref[...].astype(jnp.float32)          # (R, K), cast hoisted
        lane = jax.lax.broadcasted_iota(jnp.int32, (R, L), 1)
        acc = jnp.zeros((R, L), jnp.float32)
        for k in range(K):                          # K is small & static: unrolled
            s = k - pad                             # tap k reads x[:, p + s]
            if s == 0:
                tap = x
            else:
                amt = (-s) % L if roll_dir == "jnp" else s % L
                rolled = pltpu.roll(x, shift=amt, axis=1)
                if s < 0:                           # zero the wrapped left edge
                    tap = jnp.where(lane >= -s, rolled, 0.0)
                else:                               # zero the wrapped right edge
                    tap = jnp.where(lane < L - s, rolled, 0.0)
            acc = acc + tap * w[:, k:k + 1]
        o_ref[...] = acc[:, :L_out].astype(o_ref.dtype)

    return kernel


def _make_slice_kernel(K, pad):
    """Fallback for tiny / non-128-aligned L: zero-pad into a VMEM scratch
    inside the kernel (still no extra HBM pass), then shifted slices."""

    def kernel(x_ref, w_ref, o_ref, xp_ref):
        L = x_ref.shape[1]
        L_out = o_ref.shape[1]
        x = x_ref[...].astype(jnp.float32)
        w = w_ref[...].astype(jnp.float32)
        if pad > 0:
            xp_ref[...] = jnp.zeros_like(xp_ref)    # zero the halo columns
        xp_ref[:, pad:pad + L] = x
        xp = xp_ref[...]
        acc = jnp.zeros(o_ref.shape, jnp.float32)
        for k in range(K):
            acc = acc + xp[:, k:k + L_out] * w[:, k:k + 1]
        o_ref[...] = acc.astype(o_ref.dtype)

    return kernel


# ---------------------------------------------------------------------------
# Wrapper
# ---------------------------------------------------------------------------
def depthwise_conv1d(x, weight, padding=0):
    """Depthwise 1-D conv (torch.nn.Conv1d, groups=in_channels, bias=False).

    x:      (N, C, L)           NCL, same as torch
    weight: (C, K) or (C, 1, K) (torch depthwise Conv1d weight)
    returns (N, C, L_out), L_out = L + 2*padding - K + 1
    """
    if weight.ndim == 3:
        weight = weight[:, 0, :]
    N, C, L = x.shape
    Cw, K = weight.shape
    assert Cw == C
    L_out = L + 2 * padding - K + 1
    assert L_out >= 1, "empty output"

    rows = N * C
    x2 = x.reshape(rows, L)                 # fold batch into sublanes (free view)
    w2 = jnp.tile(weight, (N, 1))           # (rows, K) -- tiny, stays resident

    # Row tile: multiple of 8 sublanes, sized so a double-buffered input block
    # stays ~<= 2 MiB (ample headroom on v5e/v6e 128 MiB and v7x 64 MiB VMEM).
    itemsize = jnp.dtype(x.dtype).itemsize
    if rows <= 8:
        r_tile = rows
    else:
        r_budget = max(8, ((2 * 1024 * 1024) // max(1, L * itemsize)) // 8 * 8)
        r_tile = min(r_budget, (rows // 8) * 8)
    grid_rows = pl.cdiv(rows, r_tile)

    # TODO(synk): for very long sequences add halo length-chunking (manual
    # make_async_copy) so VMEM per block stays bounded; currently the full
    # length is kept resident per row-tile.
    roll_dir = _roll_direction()
    use_roll = (roll_dir != "off" and L % 128 == 0 and L >= 128
                and L_out <= L and K < L)

    if use_roll:
        kernel = _make_roll_kernel(K, padding, roll_dir)
        scratch_shapes = []
    else:
        kernel = _make_slice_kernel(K, padding)
        scratch_shapes = [pltpu.VMEM((r_tile, L + 2 * padding), jnp.float32)]

    out2 = pl.pallas_call(
        kernel,
        out_shape=jax.ShapeDtypeStruct((rows, L_out), x.dtype),
        grid_spec=pltpu.PrefetchScalarGridSpec(
            num_scalar_prefetch=0,
            grid=(grid_rows,),
            in_specs=[
                pl.BlockSpec((r_tile, L), lambda i: (i, 0)),
                pl.BlockSpec((r_tile, K), lambda i: (i, 0)),
            ],
            out_specs=pl.BlockSpec((r_tile, L_out), lambda i: (i, 0)),
            scratch_shapes=scratch_shapes,
        ),
        compiler_params=pltpu.CompilerParams(
            dimension_semantics=("parallel",),
            vmem_limit_bytes=32 * 1024 * 1024),
        cost_estimate=pl.CostEstimate(
            flops=2 * rows * L_out * K,
            bytes_accessed=(x2.size + w2.size + rows * L_out) * itemsize,
            transcendentals=0),
    )(x2, w2)

    return out2.reshape(N, C, L_out)


def _reference_depthwise_conv1d(x, weight, padding):
    C = x.shape[1]
    w = weight[:, None, :]  # (C, 1, K)
    return jax.lax.conv_general_dilated(
        x, w,
        window_strides=(1,),
        padding=[(padding, padding)],
        dimension_numbers=("NCH", "OIH", "NCH"),
        feature_group_count=C,
    )


if __name__ == "__main__":
    key = jax.random.PRNGKey(0)
    k1, k2, k3, k4 = jax.random.split(key, 4)
    K, PAD = 3, 1   # module config: kernel_size=3, padding=1, bias=False

    # Case 1: tiny shape from the module spec (exercises the fallback path).
    N, C, L = 2, 4, 16
    x = jax.random.normal(k1, (N, C, L), dtype=jnp.float32)
    w = jax.random.normal(k2, (C, K), dtype=jnp.float32) * 0.1
    out = jax.block_until_ready(depthwise_conv1d(x, w, padding=PAD))
    ref = _reference_depthwise_conv1d(x, w, PAD)
    assert out.shape == ref.shape == (N, C, L + 2 * PAD - K + 1)
    assert jnp.allclose(out, ref, atol=1e-5, rtol=1e-5)

    # Case 2: lane-dense shape (exercises the pltpu.roll fast path).
    N2, C2, L2 = 2, 8, 256
    x_b = jax.random.normal(k3, (N2, C2, L2), dtype=jnp.float32)
    w_b = jax.random.normal(k4, (C2, K), dtype=jnp.float32) * 0.1
    out_b = jax.block_until_ready(depthwise_conv1d(x_b, w_b, padding=PAD))
    ref_b = _reference_depthwise_conv1d(x_b, w_b, PAD)
    assert out_b.shape == ref_b.shape
    assert jnp.allclose(out_b, ref_b, atol=1e-5, rtol=1e-5)

    print("KERNEL_OK")
</pallas_src>

<mosaic_0001>
module attributes {stable_mosaic.version = 11 : i64} {
  func.func @probe(%arg0: memref<8x256xf32, #tpu.memory_space<vmem>>, %arg1: memref<8x256xf32, #tpu.memory_space<vmem>>) attributes {dimension_semantics = [], scalar_prefetch = 0 : i64, scratch_operands = 0 : i64, tpu.core_type = #tpu.core_type<tc>} {
    %c0 = arith.constant 0 : index
    %c0_0 = arith.constant 0 : index
    %0 = vector.load %arg0[%c0, %c0_0] : memref<8x256xf32, #tpu.memory_space<vmem>>, vector<8x256xf32>
    %c1_i32 = arith.constant 1 : i32
    %1 = tpu.dynamic_rotate %0 by %c1_i32 dim 1 : vector<8x256xf32>, i32 -> vector<8x256xf32>
    %c0_1 = arith.constant 0 : index
    %c0_2 = arith.constant 0 : index
    %2 = vector.load %arg0[%c0_1, %c0_2] : memref<8x256xf32, #tpu.memory_space<vmem>>, vector<8x256xf32>
    %c255_i32 = arith.constant 255 : i32
    %3 = tpu.dynamic_rotate %2 by %c255_i32 dim 1 : vector<8x256xf32>, i32 -> vector<8x256xf32>
    %cst = arith.constant 1.000000e+03 : f32
    %4 = vector.broadcast %cst : f32 to vector<8x256xf32>
    %5 = arith.mulf %4, %3 : vector<8x256xf32>
    %6 = arith.addf %1, %5 : vector<8x256xf32>
    %c0_3 = arith.constant 0 : index
    %c0_4 = arith.constant 0 : index
    %7 = vector.load %arg1[%c0_3, %c0_4] : memref<8x256xf32, #tpu.memory_space<vmem>>, vector<8x256xf32>
    tpu.vector_store %arg1[%c0_3, %c0_4], %6 {strides = array<i32>} : memref<8x256xf32, #tpu.memory_space<vmem>>, vector<8x256xf32>,
    return
  }
}

module attributes {stable_mosaic.version = 11 : i64} {
  func.func @kernel(%arg0: i32, %arg1: memref<8x16xf32, #tpu.memory_space<vmem>>, %arg2: memref<8x3xf32, #tpu.memory_space<vmem>>, %arg3: memref<8x16xf32, #tpu.memory_space<vmem>>, %arg4: memref<8x18xf32, #tpu.memory_space<vmem>>) attributes {dimension_semantics = [#tpu.dimension_semantics<parallel>], iteration_bounds = array<i64: 1>, scalar_prefetch = 0 : i64, scratch_operands = 1 : i64, tpu.core_type = #tpu.core_type<tc>, window_params = [{transform_indices = @transform_0, window_bounds = array<i64: 8, 16>}, {transform_indices = @transform_1, window_bounds = array<i64: 8, 3>}, {transform_indices = @transform_2, window_bounds = array<i64: 8, 16>}]} {
    %c0 = arith.constant 0 : index
    %c0_0 = arith.constant 0 : index
    %0 = vector.load %arg1[%c0, %c0_0] : memref<8x16xf32, #tpu.memory_space<vmem>>, vector<8x16xf32>
    %c0_1 = arith.constant 0 : index
    %c0_2 = arith.constant 0 : index
    %1 = vector.load %arg2[%c0_1, %c0_2] : memref<8x3xf32, #tpu.memory_space<vmem>>, vector<8x3xf32>
    %cst = arith.constant 0.000000e+00 : f32
    %2 = vector.broadcast %cst : f32 to vector<8x18xf32>
    %c0_3 = arith.constant 0 : index
    %c0_4 = arith.constant 0 : index
    %3 = vector.load %arg4[%c0_3, %c0_4] : memref<8x18xf32, #tpu.memory_space<vmem>>, vector<8x18xf32>
    tpu.vector_store %arg4[%c0_3, %c0_4], %2 {strides = array<i32>} : memref<8x18xf32, #tpu.memory_space<vmem>>, vector<8x18xf32>,
    %c0_5 = arith.constant 0 : index
    %c1 = arith.constant 1 : index
    %4 = vector.load %arg4[%c0_5, %c1] : memref<8x18xf32, #tpu.memory_space<vmem>>, vector<8x16xf32>
    tpu.vector_store %arg4[%c0_5, %c1], %0 {strides = array<i32>} : memref<8x18xf32, #tpu.memory_space<vmem>>, vector<8x16xf32>,
    %c0_6 = arith.constant 0 : index
    %c0_7 = arith.constant 0 : index
    %5 = vector.load %arg4[%c0_6, %c0_7] : memref<8x18xf32, #tpu.memory_space<vmem>>, vector<8x18xf32>
    %cst_8 = arith.constant 0.000000e+00 : f32
    %6 = vector.broadcast %cst_8 : f32 to vector<8x16xf32>
    %7 = vector.extract_strided_slice %5 {offsets = [0, 0], sizes = [8, 16], strides = [1, 1]} : vector<8x18xf32> to vector<8x16xf32>
    %8 = vector.extract_strided_slice %1 {offsets = [0, 0], sizes = [8, 1], strides = [1, 1]} : vector<8x3xf32> to vector<8x1xf32>
    %9 = vector.broadcast %8 : vector<8x1xf32> to vector<8x16xf32>
    %10 = arith.mulf %7, %9 : vector<8x16xf32>
    %11 = arith.addf %6, %10 : vector<8x16xf32>
    %12 = vector.extract_strided_slice %5 {offsets = [0, 1], sizes = [8, 16], strides = [1, 1]} : vector<8x18xf32> to vector<8x16xf32>
    %13 = vector.extract_strided_slice %1 {offsets = [0, 1], sizes = [8, 1], strides = [1, 1]} : vector<8x3xf32> to vector<8x1xf32>
    %14 = vector.broadcast %13 : vector<8x1xf32> to vector<8x16xf32>
    %15 = arith.mulf %12, %14 : vector<8x16xf32>
    %16 = arith.addf %11, %15 : vector<8x16xf32>
    %17 = vector.extract_strided_slice %5 {offsets = [0, 2], sizes = [8, 16], strides = [1, 1]} : vector<8x18xf32> to vector<8x16xf32>
    %18 = vector.extract_strided_slice %1 {offsets = [0, 2], sizes = [8, 1], strides = [1, 1]} : vector<8x3xf32> to vector<8x1xf32>
    %19 = vector.broadcast %18 : vector<8x1xf32> to vector<8x16xf32>
    %20 = arith.mulf %17, %19 : vector<8x16xf32>
    %21 = arith.addf %16, %20 : vector<8x16xf32>
    %c0_9 = arith.constant 0 : index
    %c0_10 = arith.constant 0 : index
    %22 = vector.load %arg3[%c0_9, %c0_10] : memref<8x16xf32, #tpu.memory_space<vmem>>, vector<8x16xf32>
    tpu.vector_store %arg3[%c0_9, %c0_10], %21 {strides = array<i32>} : memref<8x16xf32, #tpu.memory_space<vmem>>, vector<8x16xf32>,
    return
  }
  func.func @transform_0(%arg0: i32) -> (i32, i32) {
    %c0_i32 = arith.constant 0 : i32
    %c0_i32_0 = arith.constant 0 : i32
    return %arg0, %c0_i32 : i32, i32
  }
  func.func @transform_1(%arg0: i32) -> (i32, i32) {
    %c0_i32 = arith.constant 0 : i32
    %c0_i32_0 = arith.constant 0 : i32
    return %arg0, %c0_i32 : i32, i32
  }
  func.func @transform_2(%arg0: i32) -> (i32, i32) {
    %c0_i32 = arith.constant 0 : i32
    %c0_i32_0 = arith.constant 0 : i32
    return %arg0, %c0_i32 : i32, i32
  }
}

</mosaic_0001>

<llo_original>
// kernel: tpu_custom_call.1
$region0: #{tpu_custom_call.1}
  #allocation0 [shape = 'u32[]', space=smem, size = 0x4, offset = 0x4, fixed_abs, tag = 'smem constant byte address 0x4 - core index']
  #allocation1 [shape = 'u32[144,128]{1,0:T(1,128)}', space=vmem, size = 0x12000, scoped, tag = 'internal scratch']
  %s0 = inlined_call_operand.hbm [shape: f32[8,256], index: 0, kind: input, shape index: {}]
  %s1 = inlined_call_operand.hbm [shape: f32[8,256], index: 1, kind: output, shape index: {}]
  %s2 = sld [smem:[#allocation0]]
  $region18: #{tpu_custom_call.1} parent=0
    _
  %s4 = ssub.s32 1, %s2
  %s5 = scalar_select 0, %s4, %s2
  $region1: #{tpu_custom_call.1} parent=0
    #allocation2 [shape = 'u8[8192]{0}', space=vmem, size = 0x2000, scoped, tag = 'input window, operand 0, single buffered']
    #allocation3 [shape = 's32[1]{0}', space=sflag, size = 0x4, scoped, tag = 'scoped memory for tpu_custom_call.1']
    #allocation4 [shape = 's32[1]{0}', space=sflag, size = 0x4, scoped, tag = 'scoped memory for tpu_custom_call.1']
    #allocation5 [shape = 'u8[8192]{0}', space=vmem, size = 0x2000, scoped, tag = 'output window, operand 0, single buffered']
    %6 = vsyncpa [#allocation3], 0
    %7 = vsyncpa [#allocation4], 0
    // Predicated region
    $region2: #{tpu_custom_call.1} parent=1 // pred_check
      _
    $region3: #{tpu_custom_call.1} parent=1 // pred_check_branch
      %9 = sbr.rel (0) target = $region5
    $region4: #{tpu_custom_call.1} parent=1 // pred_region
      %s11 = ssub.s32 256, 256
      %12 = vsyncadd [#allocation3], %s11
      %s14 = sshll.u32 [#allocation2], 4
      %s15 = int_to_ptr.vmem [resolvable:$true] %s14
      %17 = dma.hbm_to_vmem [thread:$0]  %s0, 256, %s15, [#allocation3]
    $region5: #{tpu_custom_call.1} parent=1 // pred_fallthru
      _
    // Predicated region
    $region6: #{tpu_custom_call.1} parent=1 // pred_check
      _
    $region7: #{tpu_custom_call.1} parent=1 // pred_check_branch
      %19 = sbr.rel (0) target = $region9
    $region8: #{tpu_custom_call.1} parent=1 // pred_region
      %20 = dma.done [#allocation3], 256
    $region9: #{tpu_custom_call.1} parent=1 // pred_fallthru
      _
    %v21 = vld [vmem:[#allocation2] sm:$0xff]
    %v22 = vld [vmem:[#allocation2 + $0x8] sm:$0xff]
    %23 = vrot.lane.b32.xlu0 %v21, 1
    %v24 = vpop.permute.xlu0 %23
    %25 = vrot.lane.b32.xlu0 %v22, 1
    %v26 = vpop.permute.xlu0 %25
    %v27 = vlaneseq
    %v28 = vand.u32 %v27, 127
    %vm29 = vcmp.lt.s32.totalorder %v28, 1
    %v30 = vsel %vm29, %v24, %v26
    %v31 = vsel %vm29, %v26, %v24
    %32 = vrot.lane.b32.xlu0 %v21, 127
    %v33 = vpop.permute.xlu0 %32
    %34 = vrot.lane.b32.xlu0 %v22, 127
    %v35 = vpop.permute.xlu0 %34
    %vm36 = vcmp.lt.s32.totalorder %v28, 127
    %v37 = vsel %vm36, %v33, %v35
    %v38 = vsel %vm36, %v35, %v33
    %v39 = vmul.f32 %v37, 1000.0
    %v40 = vmul.f32 %v38, 1000.0
    %v41 = vadd.f32 %v31, %v39
    %v42 = vadd.f32 %v30, %v40
    %43 = vst [vmem:[#allocation5] sm:$0xff] %v41
    %44 = vst [vmem:[#allocation5 + $0x8] sm:$0xff] %v42
    // Predicated region
    $region10: #{tpu_custom_call.1} parent=1 // pred_check
      _
    $region11: #{tpu_custom_call.1} parent=1 // pred_check_branch
      %46 = sbr.rel (0) target = $region13
    $region12: #{tpu_custom_call.1} parent=1 // pred_region
      %s48 = ssub.s32 256, 256
      %49 = vsyncadd [#allocation4], %s48
      %s51 = sshll.u32 [#allocation5], 4
      %s52 = int_to_ptr.vmem [resolvable:$true] %s51
      %54 = dma.vmem_to_hbm [thread:$0]  %s52, 256, %s1, [#allocation4]
    $region13: #{tpu_custom_call.1} parent=1 // pred_fallthru
      _
    // Predicated region
    $region14: #{tpu_custom_call.1} parent=1 // pred_check
      _
    $region15: #{tpu_custom_call.1} parent=1 // pred_check_branch
      %56 = sbr.rel (0) target = $region17
    $region16: #{tpu_custom_call.1} parent=1 // pred_region
      %57 = dma.done [#allocation4], 256
    $region17: #{tpu_custom_call.1} parent=1 // pred_fallthru
      _
    %58 = vsyncpa [#allocation3], 1
    %59 = vsyncpa [#allocation4], 1

// kernel: tpu_custom_call.1
$region0: #{tpu_custom_call.1}
  #allocation0 [shape = 'u32[]', space=smem, size = 0x4, offset = 0x4, fixed_abs, tag = 'smem constant byte address 0x4 - core index']
  #allocation1 [shape = 'u32[144,128]{1,0:T(1,128)}', space=vmem, size = 0x12000, scoped, tag = 'internal scratch']
  #allocation2 [shape = 'f32[8,18]{1,0:T(8,128)}', space=vmem, size = 0x1000, scoped, tag = 'scratch operand']
  %s0 = inlined_call_operand.vmem [shape: f32[8,16], index: 0, kind: input, shape index: {}]
  %s1 = inlined_call_operand.vmem [shape: f32[8,3], index: 1, kind: input, shape index: {}]
  %s2 = inlined_call_operand.hbm [shape: f32[8,16], index: 2, kind: output, shape index: {}]
  %s3 = sld [smem:[#allocation0]]
  $region18: #{tpu_custom_call.1} parent=0
    _
  %s5 = ssub.s32 1, %s3
  %s6 = scalar_select 0, %s5, %s3
  $region1: #{tpu_custom_call.1} parent=0
    #allocation3 [shape = 'u8[4096]{0}', space=vmem, size = 0x1000, scoped, tag = 'output window, operand 0, single buffered']
    #allocation4 [shape = 's32[1]{0}', space=sflag, size = 0x4, scoped, tag = 'scoped memory for tpu_custom_call.1']
    %7 = vsyncpa [#allocation4], 0
    // Predicated region
    $region2: #{tpu_custom_call.1} parent=1 // pred_check
      _
    $region3: #{tpu_custom_call.1} parent=1 // pred_check_branch
      %9 = sbr.rel (0) target = $region5
    $region4: #{tpu_custom_call.1} parent=1 // pred_region
      _
    $region5: #{tpu_custom_call.1} parent=1 // pred_fallthru
      _
    // Predicated region
    $region6: #{tpu_custom_call.1} parent=1 // pred_check
      _
    $region7: #{tpu_custom_call.1} parent=1 // pred_check_branch
      %11 = sbr.rel (0) target = $region9
    $region8: #{tpu_custom_call.1} parent=1 // pred_region
      _
    $region9: #{tpu_custom_call.1} parent=1 // pred_fallthru
      _
    %v12 = vld [vmem:[%s0] sm:$0xff]
    %v13 = vld [vmem:[%s1] sm:$0xff]
    %vm14 = vcmask 146432
    %15 = vst.msk [vmem:[#allocation2] sm:$0xff] %vm14, 0.0
    %17 = vrot.lane.b32.xlu0 %v12, 1
    %v18 = vpop.permute.xlu0 %17
    %vm20 = vcmask 138248
    %21 = vst.msk [vmem:[#allocation2] sm:$0xff] %vm20, %v18
    %v22 = vld [vmem:[#allocation2] sm:$0xff]
    %24 = vset.pattern.permute.xlu0 0
    %25 = vperm.xlu0 %24, %v13
    %v26 = vpop.permute.xlu0 %25
    %v28 = vmul.f32 %v22, %v26
    %v29 = vadd.f32 %v28, 0.0
    %30 = vset.pattern.permute.xlu0 1
    %31 = vperm.xlu0 %30, %v13
    %v32 = vpop.permute.xlu0 %31
    %v34 = vmul.f32 %v22, %v32
    %36 = vrot.lane.b32.xlu0 %v34, 127
    %v37 = vpop.permute.xlu0 %36
    %v39 = vadd.f32 %v29, %v37
    %40 = vset.pattern.permute.xlu0 2
    %41 = vperm.xlu0 %40, %v13
    %v42 = vpop.permute.xlu0 %41
    %v44 = vmul.f32 %v22, %v42
    %46 = vrot.lane.b32.xlu0 %v44, 126
    %v47 = vpop.permute.xlu0 %46
    %v49 = vadd.f32 %v39, %v47
    %vm50 = vcmask 130048
    %51 = vst.msk [vmem:[#allocation3] sm:$0xff] %vm50, %v49
    // Predicated region
    $region10: #{tpu_custom_call.1} parent=1 // pred_check
      _
    $region11: #{tpu_custom_call.1} parent=1 // pred_check_branch
      %53 = sbr.rel (0) target = $region13
    $region12: #{tpu_custom_call.1} parent=1 // pred_region
      %s55 = ssub.s32 128, 128
      %56 = vsyncadd [#allocation4], %s55
      %s58 = sshll.u32 [#allocation3], 4
      %s59 = int_to_ptr.vmem [resolvable:$true] %s58
      %61 = dma.vmem_to_hbm [thread:$0]  %s59, 128, %s2, [#allocation4]
    $region13: #{tpu_custom_call.1} parent=1 // pred_fallthru
      _
    // Predicated region
    $region14: #{tpu_custom_call.1} parent=1 // pred_check
      _
    $region15: #{tpu_custom_call.1} parent=1 // pred_check_branch
      %63 = sbr.rel (0) target = $region17
    $region16: #{tpu_custom_call.1} parent=1 // pred_region
      %64 = dma.done [#allocation4], 128
    $region17: #{tpu_custom_call.1} parent=1 // pred_fallthru
      _
    %65 = vsyncpa [#allocation4], 1

</llo_original>
